<compile_context>
chip_gen: v5e
topology: v5e:2x2
jax: 0.10.0
libtpu: 0.0.40
codegen_flags: <defaults>
</compile_context>

<pallas_src>
import jax
import jax.numpy as jnp
from jax.experimental import pallas as pl
from jax.experimental.pallas import tpu as pltpu

LANE = 128              # TPU lane width; dims 6 / 100 padded to this
DEFAULT_BLOCK_B = 2048  # fits comfortably in default scoped VMEM on v5e/v6e/v7x


def _round_up(n, m):
    return ((n + m - 1) // m) * m


def _pad2(a, rows, cols):
    """Zero-pad a 2-D array up to (rows, cols). Zeros keep live lanes exact
    (relu(0)=0, tanh(0)=0, zero rows/cols contribute nothing downstream)."""
    out = jnp.zeros((rows, cols), a.dtype)
    return out.at[: a.shape[0], : a.shape[1]].set(a)


def _net_kernel(x_ref, w1_ref, b1_ref, w2_ref, b2_ref, wd_ref, bd_ref, o_ref):
    x = x_ref[...]                     # (BB, 2) f32

    # fc1 (K=2, N=6 padded to 128) on the VPU: two broadcast FMAs.
    # Keeps the MXU / vector-extended slot free for fc2.
    y1 = x[:, 0:1] * w1_ref[0:1, :] + x[:, 1:2] * w1_ref[1:2, :] + b1_ref[...]
    y1 = jnp.maximum(y1, 0.0)          # (BB, 128); padded lanes stay exactly 0

    # fc2 + tanh: the one lane-dense 128x128 MXU matmul, f32 accumulation.
    y2 = jnp.tanh(
        jnp.dot(y1, w2_ref[...], preferred_element_type=jnp.float32) + b2_ref[...]
    )                                  # (BB, 128); padded lanes tanh(0) = 0

    # fc3 collapsed to the logit difference (padded lanes of y2/wd are 0, so
    # the full-lane reduction equals the 100-lane reduction exactly):
    #   d = y3[:,0] - y3[:,1]
    d = jnp.sum(y2 * wd_ref[...], axis=1, keepdims=True) + bd_ref[0, 0]  # (BB, 1)

    # 2-class log_softmax, closed form with shared exp/log1p (EUP only, no
    # cross-class reductions):
    #   out0 = -softplus(-d) = min(d,0) - t,  out1 = -softplus(d) = min(-d,0) - t
    t = jnp.log1p(jnp.exp(-jnp.abs(d)))
    out0 = jnp.minimum(d, 0.0) - t
    out1 = jnp.minimum(-d, 0.0) - t
    o_ref[...] = jnp.concatenate([out0, out1], axis=1).astype(o_ref.dtype)


def net_forward(x, params, block_b=DEFAULT_BLOCK_B):
    w1, b1, w2, b2, w3, b3 = params
    B = x.shape[0]

    # Pick a batch block: multiple of 8, no bigger than needed for tiny B.
    bb = min(_round_up(max(block_b, 8), 8), _round_up(max(B, 8), 8))
    B_pad = _round_up(max(B, 8), bb)
    if B_pad != B:
        x = jnp.pad(x, ((0, B_pad - B), (0, 0)))

    # Zero-pad parameters to hardware tiles (cheap, done once in the wrapper).
    w1p = _pad2(w1, 8, LANE)                                   # (2, 6)   live
    b1p = _pad2(b1, 1, LANE)                                   # (1, 6)   live
    w2p = _pad2(w2, LANE, LANE)                                # (6, 100) live
    b2p = _pad2(b2, 1, LANE)                                   # (1, 100) live
    wdp = _pad2((w3[:, 0] - w3[:, 1]).reshape(1, -1), 1, LANE)  # (1, 100) live
    bd = (b3[:, 0] - b3[:, 1]).reshape(1, 1)                   # SMEM scalar

    grid = (B_pad // bb,)
    # Params use constant block indices -> resident in VMEM across the grid.
    const = lambda shape: pl.BlockSpec(shape, lambda i: (0, 0))

    out = pl.pallas_call(
        _net_kernel,
        out_shape=jax.ShapeDtypeStruct((B_pad, 2), jnp.float32),
        grid=grid,
        in_specs=[
            pl.BlockSpec((bb, 2), lambda i: (i, 0)),            # x: streamed
            const((8, LANE)),                                   # w1
            const((1, LANE)),                                   # b1
            const((LANE, LANE)),                                # w2
            const((1, LANE)),                                   # b2
            const((1, LANE)),                                   # w3[:,0]-w3[:,1]
            pl.BlockSpec(memory_space=pltpu.MemorySpace.SMEM),  # b3[0]-b3[1]
        ],
        out_specs=pl.BlockSpec((bb, 2), lambda i: (i, 0)),
        compiler_params=pltpu.CompilerParams(
            dimension_semantics=("parallel",),
        ),
    )(x, w1p, b1p, w2p, b2p, wdp, bd)

    return out[:B]


def init_params(key):
    # Deterministic synthetic init (PyTorch-like uniform fan-in scaling).
    # Weights stored as (in, out); biases as (1, out).
    k1, k2, k3, k4, k5, k6 = jax.random.split(key, 6)

    def lin(kw, kb, fan_in, fan_out):
        bound = 1.0 / jnp.sqrt(fan_in)
        w = jax.random.uniform(kw, (fan_in, fan_out), jnp.float32, -bound, bound)
        b = jax.random.uniform(kb, (1, fan_out), jnp.float32, -bound, bound)
        return w, b

    w1, b1 = lin(k1, k2, 2, 6)
    w2, b2 = lin(k3, k4, 6, 100)
    w3, b3 = lin(k5, k6, 100, 2)
    return (w1, b1, w2, b2, w3, b3)


def net_forward_ref(x, params):
    w1, b1, w2, b2, w3, b3 = params
    y1 = jnp.maximum(x @ w1 + b1, 0.0)
    y2 = jnp.tanh(y1 @ w2 + b2)
    y3 = y2 @ w3 + b3
    return jax.nn.log_softmax(y3, axis=1)


if __name__ == "__main__":
    key = jax.random.PRNGKey(0)
    kx, kp = jax.random.split(key)
    params = init_params(kp)

    # Small primary test (single grid step).
    B = 8
    x = jax.random.normal(kx, (B, 2), jnp.float32)
    out = net_forward(x, params)
    jax.block_until_ready(out)
    ref = net_forward_ref(x, params)
    assert out.shape == (B, 2)
    assert jnp.allclose(out, ref, atol=1e-4, rtol=1e-4)

    # Secondary test exercising the batch grid + ragged tail padding.
    B2 = 40
    x2 = jax.random.normal(jax.random.fold_in(kx, 1), (B2, 2), jnp.float32)
    out2 = net_forward(x2, params, block_b=16)   # grid=(3,), 8 padded rows
    jax.block_until_ready(out2)
    ref2 = net_forward_ref(x2, params)
    assert out2.shape == (B2, 2)
    assert jnp.allclose(out2, ref2, atol=1e-4, rtol=1e-4)

    print("KERNEL_OK")
</pallas_src>

<mosaic_0001>
module attributes {stable_mosaic.version = 11 : i64} {
  func.func @_net_kernel(%arg0: i32, %arg1: memref<8x2xf32, #tpu.memory_space<vmem>>, %arg2: memref<8x128xf32, #tpu.memory_space<vmem>>, %arg3: memref<1x128xf32, #tpu.memory_space<vmem>>, %arg4: memref<128x128xf32, #tpu.memory_space<vmem>>, %arg5: memref<1x128xf32, #tpu.memory_space<vmem>>, %arg6: memref<1x128xf32, #tpu.memory_space<vmem>>, %arg7: memref<1x1xf32, #tpu.memory_space<smem>>, %arg8: memref<8x2xf32, #tpu.memory_space<vmem>>) attributes {dimension_semantics = [#tpu.dimension_semantics<parallel>], iteration_bounds = array<i64: 1>, scalar_prefetch = 0 : i64, scratch_operands = 0 : i64, tpu.core_type = #tpu.core_type<tc>, window_params = [{transform_indices = @transform_0, window_bounds = array<i64: 8, 2>}, {pipeline_mode = #tpu.pipeline_mode<synchronous>, transform_indices = @transform_1, window_bounds = array<i64: 8, 128>}, {pipeline_mode = #tpu.pipeline_mode<synchronous>, transform_indices = @transform_2, window_bounds = array<i64: 1, 128>}, {pipeline_mode = #tpu.pipeline_mode<synchronous>, transform_indices = @transform_3, window_bounds = array<i64: 128, 128>}, {pipeline_mode = #tpu.pipeline_mode<synchronous>, transform_indices = @transform_4, window_bounds = array<i64: 1, 128>}, {pipeline_mode = #tpu.pipeline_mode<synchronous>, transform_indices = @transform_5, window_bounds = array<i64: 1, 128>}, {transform_indices = @transform_6, window_bounds = array<i64: 1, 1>}, {transform_indices = @transform_7, window_bounds = array<i64: 8, 2>}]} {
    %c0 = arith.constant 0 : index
    %c0_0 = arith.constant 0 : index
    %0 = vector.load %arg1[%c0, %c0_0] : memref<8x2xf32, #tpu.memory_space<vmem>>, vector<8x2xf32>
    %1 = vector.extract_strided_slice %0 {offsets = [0, 0], sizes = [8, 1], strides = [1, 1]} : vector<8x2xf32> to vector<8x1xf32>
    %c0_1 = arith.constant 0 : index
    %c0_2 = arith.constant 0 : index
    %2 = vector.load %arg2[%c0_1, %c0_2] : memref<8x128xf32, #tpu.memory_space<vmem>>, vector<1x128xf32>
    %3 = vector.broadcast %1 : vector<8x1xf32> to vector<8x128xf32>
    %4 = vector.broadcast %2 : vector<1x128xf32> to vector<8x128xf32>
    %5 = arith.mulf %3, %4 : vector<8x128xf32>
    %6 = vector.extract_strided_slice %0 {offsets = [0, 1], sizes = [8, 1], strides = [1, 1]} : vector<8x2xf32> to vector<8x1xf32>
    %c1 = arith.constant 1 : index
    %c0_3 = arith.constant 0 : index
    %7 = vector.load %arg2[%c1, %c0_3] : memref<8x128xf32, #tpu.memory_space<vmem>>, vector<1x128xf32>
    %8 = vector.broadcast %6 : vector<8x1xf32> to vector<8x128xf32>
    %9 = vector.broadcast %7 : vector<1x128xf32> to vector<8x128xf32>
    %10 = arith.mulf %8, %9 : vector<8x128xf32>
    %11 = arith.addf %5, %10 : vector<8x128xf32>
    %c0_4 = arith.constant 0 : index
    %c0_5 = arith.constant 0 : index
    %12 = vector.load %arg3[%c0_4, %c0_5] : memref<1x128xf32, #tpu.memory_space<vmem>>, vector<1x128xf32>
    %13 = vector.broadcast %12 : vector<1x128xf32> to vector<8x128xf32>
    %14 = arith.addf %11, %13 : vector<8x128xf32>
    %cst = arith.constant 0.000000e+00 : f32
    %15 = vector.broadcast %cst : f32 to vector<8x128xf32>
    %16 = arith.maximumf %14, %15 : vector<8x128xf32>
    %c0_6 = arith.constant 0 : index
    %c0_7 = arith.constant 0 : index
    %17 = vector.load %arg4[%c0_6, %c0_7] : memref<128x128xf32, #tpu.memory_space<vmem>>, vector<128x128xf32>
    %cst_8 = arith.constant dense<0.000000e+00> : vector<8x128xf32>
    %18 = tpu.matmul %16, %17, %cst_8 {dimension_numbers = #tpu.dot_dimension_numbers<[1], [0], [0], [1], [0, 0, 1, 1], [], []>} : vector<8x128xf32>, vector<128x128xf32>, vector<8x128xf32> -> vector<8x128xf32>
    %c0_9 = arith.constant 0 : index
    %c0_10 = arith.constant 0 : index
    %19 = vector.load %arg5[%c0_9, %c0_10] : memref<1x128xf32, #tpu.memory_space<vmem>>, vector<1x128xf32>
    %20 = vector.broadcast %19 : vector<1x128xf32> to vector<8x128xf32>
    %21 = arith.addf %18, %20 : vector<8x128xf32>
    %22 = math.tanh %21 : vector<8x128xf32>
    %c0_11 = arith.constant 0 : index
    %c0_12 = arith.constant 0 : index
    %23 = vector.load %arg6[%c0_11, %c0_12] : memref<1x128xf32, #tpu.memory_space<vmem>>, vector<1x128xf32>
    %24 = vector.broadcast %23 : vector<1x128xf32> to vector<8x128xf32>
    %25 = arith.mulf %22, %24 : vector<8x128xf32>
    %cst_13 = arith.constant dense<0.000000e+00> : vector<8xf32>
    %26 = vector.multi_reduction <add>, %25, %cst_13 [1] : vector<8x128xf32> to vector<8xf32>
    %27 = vector.shape_cast %26 : vector<8xf32> to vector<8x1xf32>
    %c0_14 = arith.constant 0 : index
    %c0_15 = arith.constant 0 : index
    %28 = memref.load %arg7[%c0_14, %c0_15] : memref<1x1xf32, #tpu.memory_space<smem>>
    %29 = vector.broadcast %28 : f32 to vector<8x1xf32>
    %30 = arith.addf %27, %29 : vector<8x1xf32>
    %31 = math.absf %30 : vector<8x1xf32>
    %cst_16 = arith.constant 0.000000e+00 : f32
    %32 = vector.broadcast %cst_16 : f32 to vector<8x1xf32>
    %33 = arith.subf %32, %31 : vector<8x1xf32>
    %34 = math.exp %33 : vector<8x1xf32>
    %35 = math.log1p %34 : vector<8x1xf32>
    %cst_17 = arith.constant 0.000000e+00 : f32
    %36 = vector.broadcast %cst_17 : f32 to vector<8x1xf32>
    %37 = arith.minimumf %30, %36 : vector<8x1xf32>
    %38 = arith.subf %37, %35 : vector<8x1xf32>
    %cst_18 = arith.constant 0.000000e+00 : f32
    %39 = vector.broadcast %cst_18 : f32 to vector<8x1xf32>
    %40 = arith.subf %39, %30 : vector<8x1xf32>
    %cst_19 = arith.constant 0.000000e+00 : f32
    %41 = vector.broadcast %cst_19 : f32 to vector<8x1xf32>
    %42 = arith.minimumf %40, %41 : vector<8x1xf32>
    %43 = arith.subf %42, %35 : vector<8x1xf32>
    %44 = tpu.concatenate %38, %43 in 1 : vector<8x1xf32>, vector<8x1xf32> -> vector<8x2xf32>
    %c0_20 = arith.constant 0 : index
    %c0_21 = arith.constant 0 : index
    %45 = vector.load %arg8[%c0_20, %c0_21] : memref<8x2xf32, #tpu.memory_space<vmem>>, vector<8x2xf32>
    tpu.vector_store %arg8[%c0_20, %c0_21], %44 {strides = array<i32>} : memref<8x2xf32, #tpu.memory_space<vmem>>, vector<8x2xf32>,
    return
  }
  func.func @transform_0(%arg0: i32) -> (i32, i32) {
    %c0_i32 = arith.constant 0 : i32
    %c0_i32_0 = arith.constant 0 : i32
    return %arg0, %c0_i32 : i32, i32
  }
  func.func @transform_1(%arg0: i32) -> (i32, i32) {
    %c0_i32 = arith.constant 0 : i32
    %c0_i32_0 = arith.constant 0 : i32
    %c0_i32_1 = arith.constant 0 : i32
    return %c0_i32, %c0_i32_0 : i32, i32
  }
  func.func @transform_2(%arg0: i32) -> (i32, i32) {
    %c0_i32 = arith.constant 0 : i32
    %c0_i32_0 = arith.constant 0 : i32
    %c0_i32_1 = arith.constant 0 : i32
    return %c0_i32, %c0_i32_0 : i32, i32
  }
  func.func @transform_3(%arg0: i32) -> (i32, i32) {
    %c0_i32 = arith.constant 0 : i32
    %c0_i32_0 = arith.constant 0 : i32
    %c0_i32_1 = arith.constant 0 : i32
    return %c0_i32, %c0_i32_0 : i32, i32
  }
  func.func @transform_4(%arg0: i32) -> (i32, i32) {
    %c0_i32 = arith.constant 0 : i32
    %c0_i32_0 = arith.constant 0 : i32
    %c0_i32_1 = arith.constant 0 : i32
    return %c0_i32, %c0_i32_0 : i32, i32
  }
  func.func @transform_5(%arg0: i32) -> (i32, i32) {
    %c0_i32 = arith.constant 0 : i32
    %c0_i32_0 = arith.constant 0 : i32
    %c0_i32_1 = arith.constant 0 : i32
    return %c0_i32, %c0_i32_0 : i32, i32
  }
  func.func @transform_6(%arg0: i32) -> (i32, i32) {
    %c0_i32 = arith.constant 0 : i32
    %c0_i32_0 = arith.constant 0 : i32
    %c0_i32_1 = arith.constant 0 : i32
    return %c0_i32, %c0_i32_0 : i32, i32
  }
  func.func @transform_7(%arg0: i32) -> (i32, i32) {
    %c0_i32 = arith.constant 0 : i32
    %c0_i32_0 = arith.constant 0 : i32
    return %arg0, %c0_i32 : i32, i32
  }
}

</mosaic_0001>

<llo_original>
// kernel: tpu_custom_call.1
$region0: #{tpu_custom_call.1}
  #allocation0 [shape = 'u32[]', space=smem, size = 0x4, offset = 0x4, fixed_abs, tag = 'smem constant byte address 0x4 - core index']
  #allocation1 [shape = 'u32[72,128]{1,0:T(1,128)}', space=vmem, size = 0x9000, scoped, tag = 'internal scratch']
  #allocation2 [shape = 'f32[1,1]{1,0:T(1,128)S(6)}', space=smem, size = 0x200, scoped, tag = 'scoped memory for tpu_custom_call.1']
  %s0 = inlined_call_operand.vmem [shape: f32[8,2], index: 0, kind: input, shape index: {}]
  %s1 = inlined_call_operand.vmem [shape: f32[8,128], index: 1, kind: input, shape index: {}]
  %s2 = inlined_call_operand.vmem [shape: f32[1,128], index: 2, kind: input, shape index: {}]
  %s3 = inlined_call_operand.hbm [shape: f32[128,128], index: 3, kind: input, shape index: {}]
  %s4 = inlined_call_operand.vmem [shape: f32[1,128], index: 4, kind: input, shape index: {}]
  %s5 = inlined_call_operand.vmem [shape: f32[1,128], index: 5, kind: input, shape index: {}]
  %s6 = inlined_call_operand.<no memory space> [shape: f32[1,1], index: 6, kind: input, shape index: {}]
  %s7 = inlined_call_operand.vmem [shape: f32[8,2], index: 7, kind: output, shape index: {}]
  %s8 = sld [smem:[#allocation0]]
  $region42: #{tpu_custom_call.1} parent=0
    _
  %s10 = ssub.s32 1, %s8
  %s11 = scalar_select 0, %s10, %s8
  %12 = sst [smem:[#allocation2]] %s6
  $region1: #{tpu_custom_call.1} parent=0
    #allocation3 [shape = 'u8[65536]{0}', space=vmem, size = 0x10000, scoped, tag = 'input window, operand 3, single buffered']
    #allocation4 [shape = 's32[1]{0}', space=sflag, size = 0x4, scoped, tag = 'scoped memory for tpu_custom_call.1']
    %13 = vsyncpa [#allocation4], 0
    // Predicated region
    $region2: #{tpu_custom_call.1} parent=1 // pred_check
      _
    $region3: #{tpu_custom_call.1} parent=1 // pred_check_branch
      %15 = sbr.rel (0) target = $region5
    $region4: #{tpu_custom_call.1} parent=1 // pred_region
      _
    $region5: #{tpu_custom_call.1} parent=1 // pred_fallthru
      _
    // Predicated region
    $region6: #{tpu_custom_call.1} parent=1 // pred_check
      _
    $region7: #{tpu_custom_call.1} parent=1 // pred_check_branch
      %17 = sbr.rel (0) target = $region9
    $region8: #{tpu_custom_call.1} parent=1 // pred_region
      _
    $region9: #{tpu_custom_call.1} parent=1 // pred_fallthru
      _
    // Predicated region
    $region10: #{tpu_custom_call.1} parent=1 // pred_check
      _
    $region11: #{tpu_custom_call.1} parent=1 // pred_check_branch
      %19 = sbr.rel (0) target = $region13
    $region12: #{tpu_custom_call.1} parent=1 // pred_region
      _
    $region13: #{tpu_custom_call.1} parent=1 // pred_fallthru
      _
    // Predicated region
    $region14: #{tpu_custom_call.1} parent=1 // pred_check
      _
    $region15: #{tpu_custom_call.1} parent=1 // pred_check_branch
      %21 = sbr.rel (0) target = $region17
    $region16: #{tpu_custom_call.1} parent=1 // pred_region
      %23 = vsyncadd [#allocation4], 0
      %s24 = sshll.u32 %s3, 4
      %s25 = int_to_ptr.hbm [resolvable:$true] %s24
      %s26 = sshll.u32 [#allocation3], 4
      %s27 = int_to_ptr.vmem [resolvable:$true] %s26
      %32 = dma.hbm_to_vmem [thread:$0]  %s25, 2048, %s27, [#allocation4], 128, 128, 8
    $region17: #{tpu_custom_call.1} parent=1 // pred_fallthru
      _
    // Predicated region
    $region18: #{tpu_custom_call.1} parent=1 // pred_check
      _
    $region19: #{tpu_custom_call.1} parent=1 // pred_check_branch
      %34 = sbr.rel (0) target = $region21
    $region20: #{tpu_custom_call.1} parent=1 // pred_region
      _
    $region21: #{tpu_custom_call.1} parent=1 // pred_fallthru
      _
    // Predicated region
    $region22: #{tpu_custom_call.1} parent=1 // pred_check
      _
    $region23: #{tpu_custom_call.1} parent=1 // pred_check_branch
      %36 = sbr.rel (0) target = $region25
    $region24: #{tpu_custom_call.1} parent=1 // pred_region
      _
    $region25: #{tpu_custom_call.1} parent=1 // pred_fallthru
      _
    // Predicated region
    $region26: #{tpu_custom_call.1} parent=1 // pred_check
      _
    $region27: #{tpu_custom_call.1} parent=1 // pred_check_branch
      %38 = sbr.rel (0) target = $region29
    $region28: #{tpu_custom_call.1} parent=1 // pred_region
      _
    $region29: #{tpu_custom_call.1} parent=1 // pred_fallthru
      _
    // Predicated region
    $region30: #{tpu_custom_call.1} parent=1 // pred_check
      _
    $region31: #{tpu_custom_call.1} parent=1 // pred_check_branch
      %40 = sbr.rel (0) target = $region33
    $region32: #{tpu_custom_call.1} parent=1 // pred_region
      %42 = dma.done [#allocation4], 2048
    $region33: #{tpu_custom_call.1} parent=1 // pred_fallthru
      _
    %v43 = vld [vmem:[%s0] sm:$0xff]
    %v44 = vld [vmem:[%s1] sm:$0x1]
    %46 = vset.pattern.permute.xlu0 0
    %47 = vperm.xlu0 %46, %v43
    %v48 = vpop.permute.xlu0 %47
    %v50 = vperm.slane %v44, 0
    %v51 = vmul.f32 %v48, %v50
    %v52 = vld [vmem:[%s1 + $0x1] sm:$0x1]
    %53 = vset.pattern.permute.xlu0 1
    %54 = vperm.xlu0 %53, %v43
    %v55 = vpop.permute.xlu0 %54
    %v57 = vperm.slane %v52, 0
    %v58 = vmul.f32 %v55, %v57
    %v59 = vadd.f32 %v51, %v58
    %v60 = vld [vmem:[%s2] sm:$0x1]
    %v62 = vperm.slane %v60, 0
    %v64 = vadd.f32 %v59, %v62
    %v65 = vmax.f32 %v64, 0.0
    %v66 = vld [vmem:[#allocation3] sm:$0xff]
    %v67 = vld [vmem:[#allocation3 + $0x8] sm:$0xff]
    %v68 = vld [vmem:[#allocation3 + $0x10] sm:$0xff]
    %v69 = vld [vmem:[#allocation3 + $0x18] sm:$0xff]
    %v70 = vld [vmem:[#allocation3 + $0x20] sm:$0xff]
    %v71 = vld [vmem:[#allocation3 + $0x28] sm:$0xff]
    %v72 = vld [vmem:[#allocation3 + $0x30] sm:$0xff]
    %v73 = vld [vmem:[#allocation3 + $0x38] sm:$0xff]
    %v74 = vld [vmem:[#allocation3 + $0x40] sm:$0xff]
    %v75 = vld [vmem:[#allocation3 + $0x48] sm:$0xff]
    %v76 = vld [vmem:[#allocation3 + $0x50] sm:$0xff]
    %v77 = vld [vmem:[#allocation3 + $0x58] sm:$0xff]
    %v78 = vld [vmem:[#allocation3 + $0x60] sm:$0xff]
    %v79 = vld [vmem:[#allocation3 + $0x68] sm:$0xff]
    %v80 = vld [vmem:[#allocation3 + $0x70] sm:$0xff]
    %v81 = vld [vmem:[#allocation3 + $0x78] sm:$0xff]
    %v82 = vld [vmem:[%s4] sm:$0x1]
    %v84 = vperm.slane %v82, 0
    %86 = vmatpush.msra.mxu0 %v81
    %87 = vmatpush.msra.mxu0 %v80
    %88 = vmatpush.msra.mxu0 %v79
    %89 = vmatpush.msra.mxu0 %v78
    %90 = vmatpush.msra.mxu0 %v77
    %91 = vmatpush.msra.mxu0 %v76
    %92 = vmatpush.msra.mxu0 %v75
    %93 = vmatpush.msra.mxu0 %v74
    %94 = vmatpush.msra.mxu0 %v73
    %95 = vmatpush.msra.mxu0 %v72
    %96 = vmatpush.msra.mxu0 %v71
    %97 = vmatpush.msra.mxu0 %v70
    %98 = vmatpush.msra.mxu0 %v69
    %99 = vmatpush.msra.mxu0 %v68
    %100 = vmatpush.msra.mxu0 %v67
    %101 = vmatpush.msra.mxu0 %v66
    %102 = vmatmul.f32.gmra.mxu0 %v65
    %v103 = vpop.f32.mrf.mxu0
    %v104 = vadd.f32 %v84, %v103
    %105 = vdwg.mxu0
    %v106 = vtanh.pop %v104
    %v107 = vld [vmem:[%s5] sm:$0x1]
    %v109 = vperm.slane %v107, 0
    %v111 = vmul.f32 %v106, %v109
    %112 = vadd.xlane.f32.xlu0 %v111
    %v113 = vpop.xlane.xlu0 %112
    %s114 = sld [smem:[#allocation2]]
    %v115 = vstv %s114
    %v116 = vadd.f32 %v113, %v115
    %v117 = vand.u32 2147483647, %v116
    %v118 = vsub.f32 0.0, %v117
    %v119 = vmul.f32 %v118, 1.442695
    %v120 = vpow.pop %v119
    %v121 = vadd.f32 %v120, 1.0
    %v122 = vlog2.pop %v121
    %v123 = vmul.f32 %v122, 0.6931472
    %v124 = vmul.f32 -0.5, %v120
    %v125 = vadd.f32 %v124, 1.0
    %v126 = vmul.f32 %v125, %v120
    %v127 = vand.u32 2147483647, %v120
    %vm128 = vcmp.lt.f32.partialorder %v127, 0.0004427343
    %v129 = vsel %vm128, %v126, %v123
    %v130 = vmin.f32 %v116, 0.0
    %v131 = vsub.f32 %v130, %v129
    %v132 = vsub.f32 0.0, %v116
    %v133 = vmin.f32 %v132, 0.0
    %v134 = vsub.f32 %v133, %v129
    %vm135 = vcmask 7168
    %v136 = vsel %vm135, %v131, %v134
    %vm137 = vcmask 15360
    %138 = vst.msk [vmem:[%s7] sm:$0xff] %vm137, %v136
    // Predicated region
    $region34: #{tpu_custom_call.1} parent=1 // pred_check
      _
    $region35: #{tpu_custom_call.1} parent=1 // pred_check_branch
      %140 = sbr.rel (0) target = $region37
    $region36: #{tpu_custom_call.1} parent=1 // pred_region
      _
    $region37: #{tpu_custom_call.1} parent=1 // pred_fallthru
      _
    // Predicated region
    $region38: #{tpu_custom_call.1} parent=1 // pred_check
      _
    $region39: #{tpu_custom_call.1} parent=1 // pred_check_branch
      %142 = sbr.rel (0) target = $region41
    $region40: #{tpu_custom_call.1} parent=1 // pred_region
      _
    $region41: #{tpu_custom_call.1} parent=1 // pred_fallthru
      _
    %143 = vsyncpa [#allocation4], 1

</llo_original>
